<compile_context>
chip_gen: v6e
topology: v6e:2x2x1
jax: 0.10.0
libtpu: 0.0.40
codegen_flags: <defaults>
</compile_context>

<pallas_src>
import jax
import jax.numpy as jnp
from jax.experimental import pallas as pl
from jax.experimental.pallas import tpu as pltpu

STATE_DIM = 16
ACTION_DIM = 8
HIDDEN = 128
PAIR_DIM = ACTION_DIM * (ACTION_DIM - 1) // 2  # 28
BATCH = 8


def _ru(x, m):
    return (x + m - 1) // m * m


# ---------------- packed parameter slab layout (rows are 8-aligned) ----------------
R_WIN = 0                                   # (16, 384)  [W_v1a | W_v2a | W_vns]
R_BIN = R_WIN + _ru(STATE_DIM, 8)           # (1, 384)   [b_v1a | b_v2a | b_vns]
R_WMID = R_BIN + 8                          # (256, 256) blkdiag(W_v1b, W_v2b)
R_BMID = R_WMID + 2 * HIDDEN                # (1, 256)
R_WHEAD = R_BMID + 8                        # (256, 128) cols 0:8 = A1, 8:36 = A2
R_BHEAD = R_WHEAD + 2 * HIDDEN              # (1, 128)
R_ECAT = R_BHEAD + 8                        # (8, 56)    [e_i | e_j]
R_WVNA = R_ECAT + 8                         # (28, 128)
R_BVNA = R_WVNA + _ru(PAIR_DIM, 8)          # (1, 128)
R_WVN1 = R_BVNA + 8                         # (128, 128)
R_BVN1 = R_WVN1 + HIDDEN                    # (1, 128)
R_WVN2 = R_BVN1 + 8                         # (128, 128)
R_BVN2 = R_WVN2 + HIDDEN                    # (1, 128)
R_WAN = R_BVN2 + 8                          # (1, 128)   AN weight as a row
R_MIX = R_WAN + 8                           # (1, 8)     [w0, w1, w2, b_w, b_an]
SLAB_ROWS = _ru(R_MIX + 8, 16)              # 896 (bf16 sublane-pack friendly)
SLAB_COLS = 3 * HIDDEN                      # 384


def advantage_kernel(s_ref, a_ref, slab_ref, out_ref):
    H = HIDDEN
    bf16 = jnp.bfloat16
    f32 = jnp.float32

    def mm(x, w):
        return jnp.dot(x, w, preferred_element_type=f32)

    s = s_ref[...].astype(bf16)
    a_f32 = a_ref[...]
    a = a_f32.astype(bf16)

    # ---- fused first layer of all three state branches: [s1_l1 | s2_l1 | tanh(sn)] ----
    w_in = slab_ref[R_WIN:R_WIN + STATE_DIM, :]
    b_in = slab_ref[R_BIN:R_BIN + 1, :]
    x0 = jnp.tanh(mm(s, w_in) + b_in)                               # (bm, 384) f32

    # ---- fused block-diagonal second layer for branches 1 & 2 ----
    w_mid = slab_ref[R_WMID:R_WMID + 2 * H, 0:2 * H]
    b_mid = slab_ref[R_BMID:R_BMID + 1, 0:2 * H]
    x1 = jnp.tanh(mm(x0[:, 0:2 * H].astype(bf16), w_mid) + b_mid)   # (bm, 256)

    # ---- fused heads: h[:, 0:8] = A1(s1), h[:, 8:36] = A2(s2) ----
    w_head = slab_ref[R_WHEAD:R_WHEAD + 2 * H, 0:H]
    b_head = slab_ref[R_BHEAD:R_BHEAD + 1, 0:H]
    h = mm(x1.astype(bf16), w_head) + b_head                        # (bm, 128)

    # ---- pair products a2[b,p] = a[b,i_p] * a[b,j_p] via one fused one-hot matmul ----
    e_cat = slab_ref[R_ECAT:R_ECAT + ACTION_DIM, 0:2 * PAIR_DIM]
    a_sel = mm(a, e_cat)                                            # (bm, 56)
    a2 = a_sel[:, 0:PAIR_DIM] * a_sel[:, PAIR_DIM:2 * PAIR_DIM]     # (bm, 28)

    adv1 = jnp.sum(h[:, 0:ACTION_DIM] * a_f32, axis=1, keepdims=True)
    adv2 = jnp.sum(h[:, ACTION_DIM:ACTION_DIM + PAIR_DIM] * a2, axis=1, keepdims=True)

    # ---- branch N ----
    w_vna = slab_ref[R_WVNA:R_WVNA + PAIR_DIM, 0:H]
    b_vna = slab_ref[R_BVNA:R_BVNA + 1, 0:H]
    xn = x0[:, 2 * H:3 * H] + jnp.tanh(mm(a2.astype(bf16), w_vna) + b_vna)

    w_vn1 = slab_ref[R_WVN1:R_WVN1 + H, 0:H]
    b_vn1 = slab_ref[R_BVN1:R_BVN1 + 1, 0:H]
    xn = jnp.tanh(mm(xn.astype(bf16), w_vn1) + b_vn1)

    w_vn2 = slab_ref[R_WVN2:R_WVN2 + H, 0:H]
    b_vn2 = slab_ref[R_BVN2:R_BVN2 + 1, 0:H]
    xn = jnp.tanh(mm(xn.astype(bf16), w_vn2) + b_vn2)

    w_an_row = slab_ref[R_WAN:R_WAN + 1, 0:H].astype(f32)
    mix = slab_ref[R_MIX:R_MIX + 1, 0:8].astype(f32)                # (1, 8) scalars
    advN = jnp.sum(xn * w_an_row, axis=1, keepdims=True) + mix[0:1, 4:5]

    # ---- final mixing W: Linear(3, 1) as broadcast scalar multiplies ----
    out_ref[...] = (adv1 * mix[0:1, 0:1] + adv2 * mix[0:1, 1:2]
                    + advN * mix[0:1, 2:3] + mix[0:1, 3:4])


def advantage_forward(s, a, slab, *, block_m=256):
    """Batch-tiled forward.  `slab` is the packed bf16 parameter slab."""
    B = s.shape[0]
    bm = min(block_m, _ru(B, 8))
    Bp = _ru(B, bm)
    if Bp != B:
        s = jnp.pad(s, ((0, Bp - B), (0, 0)))
        a = jnp.pad(a, ((0, Bp - B), (0, 0)))
    grid = (Bp // bm,)
    out = pl.pallas_call(
        advantage_kernel,
        out_shape=jax.ShapeDtypeStruct((Bp, 1), jnp.float32),
        grid_spec=pltpu.PrefetchScalarGridSpec(
            num_scalar_prefetch=0,
            grid=grid,
            in_specs=[
                pl.BlockSpec((bm, STATE_DIM), lambda i: (i, 0)),
                pl.BlockSpec((bm, ACTION_DIM), lambda i: (i, 0)),
                # weight slab: constant index map -> fetched once, stays resident
                pl.BlockSpec((SLAB_ROWS, SLAB_COLS), lambda i: (0, 0)),
            ],
            out_specs=pl.BlockSpec((bm, 1), lambda i: (i, 0)),
        ),
        compiler_params=pltpu.CompilerParams(
            dimension_semantics=("parallel",),
        ),
    )(s, a, slab)
    return out[:B]


def make_params(key):
    """Deterministic synthetic init mirroring the PyTorch module shapes (fm=False)."""
    def linear(key, fan_in, fan_out, w_scale=1.0, zero_bias=False):
        kw, kb = jax.random.split(key)
        bound = 1.0 / jnp.sqrt(fan_in)
        w = jax.random.uniform(kw, (fan_in, fan_out), jnp.float32, -bound, bound)
        b = jax.random.uniform(kb, (1, fan_out), jnp.float32, -bound, bound)
        w = w * w_scale
        if zero_bias:
            b = jnp.zeros_like(b)
        return w, b

    keys = jax.random.split(key, 13)
    w_v1a, b_v1a = linear(keys[0], STATE_DIM, HIDDEN)
    w_v1b, b_v1b = linear(keys[1], HIDDEN, HIDDEN)
    w_a1, b_a1 = linear(keys[2], HIDDEN, ACTION_DIM, w_scale=0.1, zero_bias=True)
    w_v2a, b_v2a = linear(keys[3], STATE_DIM, HIDDEN)
    w_v2b, b_v2b = linear(keys[4], HIDDEN, HIDDEN)
    w_a2, b_a2 = linear(keys[5], HIDDEN, PAIR_DIM, w_scale=0.1, zero_bias=True)
    w_vns, b_vns = linear(keys[6], STATE_DIM, HIDDEN)
    w_vna, b_vna = linear(keys[7], PAIR_DIM, HIDDEN)
    w_vn1, b_vn1 = linear(keys[8], HIDDEN, HIDDEN)
    w_vn2, b_vn2 = linear(keys[9], HIDDEN, HIDDEN)
    w_an, b_an = linear(keys[10], HIDDEN, 1, w_scale=0.1, zero_bias=True)
    w_w, b_w = linear(keys[11], 3, 1)

    # strict lower-triangle index pairs (row-major, i > j), as in
    # torch.ones(n, n).tril(-1).nonzero().t()
    rows, cols = [], []
    for i in range(ACTION_DIM):
        for j in range(i):
            rows.append(i)
            cols.append(j)
    e_i = jnp.zeros((ACTION_DIM, PAIR_DIM), jnp.float32)
    e_j = jnp.zeros((ACTION_DIM, PAIR_DIM), jnp.float32)
    e_i = e_i.at[jnp.array(rows), jnp.arange(PAIR_DIM)].set(1.0)
    e_j = e_j.at[jnp.array(cols), jnp.arange(PAIR_DIM)].set(1.0)

    return (w_v1a, b_v1a, w_v1b, b_v1b,
            w_a1, b_a1,
            w_v2a, b_v2a, w_v2b, b_v2b,
            w_a2, b_a2,
            w_vns, b_vns,
            w_vna, b_vna,
            w_vn1, b_vn1, w_vn2, b_vn2,
            w_an, b_an,
            w_w, b_w,
            e_i, e_j)


def pack_params(params):
    """Pack all parameters (fused layouts) into one bf16 VMEM slab."""
    (w_v1a, b_v1a, w_v1b, b_v1b, w_a1, b_a1,
     w_v2a, b_v2a, w_v2b, b_v2b, w_a2, b_a2,
     w_vns, b_vns, w_vna, b_vna,
     w_vn1, b_vn1, w_vn2, b_vn2, w_an, b_an,
     w_w, b_w, e_i, e_j) = params
    H = HIDDEN
    A = ACTION_DIM
    slab = jnp.zeros((SLAB_ROWS, SLAB_COLS), jnp.float32)
    # fused first layer [V1a | V2a | VNs]
    slab = slab.at[R_WIN:R_WIN + STATE_DIM, 0:H].set(w_v1a)
    slab = slab.at[R_WIN:R_WIN + STATE_DIM, H:2 * H].set(w_v2a)
    slab = slab.at[R_WIN:R_WIN + STATE_DIM, 2 * H:3 * H].set(w_vns)
    slab = slab.at[R_BIN, 0:H].set(b_v1a[0])
    slab = slab.at[R_BIN, H:2 * H].set(b_v2a[0])
    slab = slab.at[R_BIN, 2 * H:3 * H].set(b_vns[0])
    # fused block-diagonal second layer
    slab = slab.at[R_WMID:R_WMID + H, 0:H].set(w_v1b)
    slab = slab.at[R_WMID + H:R_WMID + 2 * H, H:2 * H].set(w_v2b)
    slab = slab.at[R_BMID, 0:H].set(b_v1b[0])
    slab = slab.at[R_BMID, H:2 * H].set(b_v2b[0])
    # fused heads A1 / A2 (cols 0:8 / 8:36)
    slab = slab.at[R_WHEAD:R_WHEAD + H, 0:A].set(w_a1)
    slab = slab.at[R_WHEAD + H:R_WHEAD + 2 * H, A:A + PAIR_DIM].set(w_a2)
    slab = slab.at[R_BHEAD, 0:A].set(b_a1[0])
    slab = slab.at[R_BHEAD, A:A + PAIR_DIM].set(b_a2[0])
    # fused pair-selection [e_i | e_j]
    slab = slab.at[R_ECAT:R_ECAT + A, 0:PAIR_DIM].set(e_i)
    slab = slab.at[R_ECAT:R_ECAT + A, PAIR_DIM:2 * PAIR_DIM].set(e_j)
    # branch-N weights
    slab = slab.at[R_WVNA:R_WVNA + PAIR_DIM, 0:H].set(w_vna)
    slab = slab.at[R_BVNA, 0:H].set(b_vna[0])
    slab = slab.at[R_WVN1:R_WVN1 + H, 0:H].set(w_vn1)
    slab = slab.at[R_BVN1, 0:H].set(b_vn1[0])
    slab = slab.at[R_WVN2:R_WVN2 + H, 0:H].set(w_vn2)
    slab = slab.at[R_BVN2, 0:H].set(b_vn2[0])
    slab = slab.at[R_WAN, 0:H].set(w_an[:, 0])
    # final mixing scalars [w0, w1, w2, b_w, b_an]
    slab = slab.at[R_MIX, 0].set(w_w[0, 0])
    slab = slab.at[R_MIX, 1].set(w_w[1, 0])
    slab = slab.at[R_MIX, 2].set(w_w[2, 0])
    slab = slab.at[R_MIX, 3].set(b_w[0, 0])
    slab = slab.at[R_MIX, 4].set(b_an[0, 0])
    return slab.astype(jnp.bfloat16)


def advantage_ref(s, a, params):
    """Pure-JAX f32 reference mirroring the PyTorch forward (fm=False path)."""
    (w_v1a, b_v1a, w_v1b, b_v1b, w_a1, b_a1,
     w_v2a, b_v2a, w_v2b, b_v2b, w_a2, b_a2,
     w_vns, b_vns, w_vna, b_vna,
     w_vn1, b_vn1, w_vn2, b_vn2, w_an, b_an,
     w_w, b_w, e_i, e_j) = params
    act = jnp.tanh
    s1 = act(s @ w_v1a + b_v1a)
    s1 = act(s1 @ w_v1b + b_v1b)
    adv1 = jnp.sum((s1 @ w_a1 + b_a1) * a, axis=1, keepdims=True)
    s2 = act(s @ w_v2a + b_v2a)
    s2 = act(s2 @ w_v2b + b_v2b)
    s2 = s2 @ w_a2 + b_a2
    a2 = (a @ e_i) * (a @ e_j)
    adv2 = jnp.sum(a2 * s2, axis=1, keepdims=True)
    sn = s @ w_vns + b_vns
    an = a2 @ w_vna + b_vna
    xn = act(sn) + act(an)
    xn = act(xn @ w_vn1 + b_vn1)
    xn = act(xn @ w_vn2 + b_vn2)
    advN = xn @ w_an + b_an
    cat = jnp.concatenate([adv1, adv2, advN], axis=1)
    return cat @ w_w + b_w


if __name__ == "__main__":
    key = jax.random.PRNGKey(0)
    k_s, k_a, k_p = jax.random.split(key, 3)
    s = jax.random.normal(k_s, (BATCH, STATE_DIM), jnp.float32)
    a = jax.random.normal(k_a, (BATCH, ACTION_DIM), jnp.float32)
    params = make_params(k_p)
    slab = pack_params(params)

    out = advantage_forward(s, a, slab)
    out = jax.block_until_ready(out)

    ref = advantage_ref(s, a, params)
    assert out.shape == (BATCH, 1)
    # bf16 matmul operands -> tolerance loosened vs. pure-f32 (per perf review).
    assert jnp.allclose(out, ref, atol=2e-2, rtol=2e-2), (out, ref)
    print("KERNEL_OK")
</pallas_src>

<mosaic_0001>
module attributes {stable_mosaic.version = 11 : i64} {
  func.func @advantage_kernel(%arg0: i32, %arg1: memref<8x16xf32, #tpu.memory_space<vmem>>, %arg2: memref<8x8xf32, #tpu.memory_space<vmem>>, %arg3: memref<896x384xbf16, #tpu.memory_space<vmem>>, %arg4: memref<8x1xf32, #tpu.memory_space<vmem>>) attributes {dimension_semantics = [#tpu.dimension_semantics<parallel>], iteration_bounds = array<i64: 1>, scalar_prefetch = 0 : i64, scratch_operands = 0 : i64, tpu.core_type = #tpu.core_type<tc>, window_params = [{transform_indices = @transform_0, window_bounds = array<i64: 8, 16>}, {transform_indices = @transform_1, window_bounds = array<i64: 8, 8>}, {pipeline_mode = #tpu.pipeline_mode<synchronous>, transform_indices = @transform_2, window_bounds = array<i64: 896, 384>}, {transform_indices = @transform_3, window_bounds = array<i64: 8, 1>}]} {
    %c0 = arith.constant 0 : index
    %c0_0 = arith.constant 0 : index
    %0 = vector.load %arg1[%c0, %c0_0] : memref<8x16xf32, #tpu.memory_space<vmem>>, vector<8x16xf32>
    %1 = arith.truncf %0 : vector<8x16xf32> to vector<8x16xbf16>
    %c0_1 = arith.constant 0 : index
    %c0_2 = arith.constant 0 : index
    %2 = vector.load %arg2[%c0_1, %c0_2] : memref<8x8xf32, #tpu.memory_space<vmem>>, vector<8x8xf32>
    %3 = arith.truncf %2 : vector<8x8xf32> to vector<8x8xbf16>
    %c0_3 = arith.constant 0 : index
    %c0_4 = arith.constant 0 : index
    %4 = vector.load %arg3[%c0_3, %c0_4] : memref<896x384xbf16, #tpu.memory_space<vmem>>, vector<16x384xbf16>
    %c16 = arith.constant 16 : index
    %c0_5 = arith.constant 0 : index
    %5 = vector.load %arg3[%c16, %c0_5] : memref<896x384xbf16, #tpu.memory_space<vmem>>, vector<1x384xbf16>
    %cst = arith.constant dense<0.000000e+00> : vector<8x384xf32>
    %6 = tpu.matmul %1, %4, %cst {dimension_numbers = #tpu.dot_dimension_numbers<[1], [0], [0], [1], [0, 0, 1, 1], [], []>} : vector<8x16xbf16>, vector<16x384xbf16>, vector<8x384xf32> -> vector<8x384xf32>
    %7 = arith.extf %5 : vector<1x384xbf16> to vector<1x384xf32>
    %8 = vector.broadcast %7 : vector<1x384xf32> to vector<8x384xf32>
    %9 = arith.addf %6, %8 : vector<8x384xf32>
    %10 = math.tanh %9 : vector<8x384xf32>
    %c24 = arith.constant 24 : index
    %c0_6 = arith.constant 0 : index
    %11 = vector.load %arg3[%c24, %c0_6] : memref<896x384xbf16, #tpu.memory_space<vmem>>, vector<256x256xbf16>
    %c280 = arith.constant 280 : index
    %c0_7 = arith.constant 0 : index
    %12 = vector.load %arg3[%c280, %c0_7] : memref<896x384xbf16, #tpu.memory_space<vmem>>, vector<1x256xbf16>
    %13 = vector.extract_strided_slice %10 {offsets = [0, 0], sizes = [8, 256], strides = [1, 1]} : vector<8x384xf32> to vector<8x256xf32>
    %14 = arith.truncf %13 : vector<8x256xf32> to vector<8x256xbf16>
    %cst_8 = arith.constant dense<0.000000e+00> : vector<8x256xf32>
    %15 = tpu.matmul %14, %11, %cst_8 {dimension_numbers = #tpu.dot_dimension_numbers<[1], [0], [0], [1], [0, 0, 1, 1], [], []>} : vector<8x256xbf16>, vector<256x256xbf16>, vector<8x256xf32> -> vector<8x256xf32>
    %16 = arith.extf %12 : vector<1x256xbf16> to vector<1x256xf32>
    %17 = vector.broadcast %16 : vector<1x256xf32> to vector<8x256xf32>
    %18 = arith.addf %15, %17 : vector<8x256xf32>
    %19 = math.tanh %18 : vector<8x256xf32>
    %c288 = arith.constant 288 : index
    %c0_9 = arith.constant 0 : index
    %20 = vector.load %arg3[%c288, %c0_9] : memref<896x384xbf16, #tpu.memory_space<vmem>>, vector<256x128xbf16>
    %c544 = arith.constant 544 : index
    %c0_10 = arith.constant 0 : index
    %21 = vector.load %arg3[%c544, %c0_10] : memref<896x384xbf16, #tpu.memory_space<vmem>>, vector<1x128xbf16>
    %22 = arith.truncf %19 : vector<8x256xf32> to vector<8x256xbf16>
    %cst_11 = arith.constant dense<0.000000e+00> : vector<8x128xf32>
    %23 = tpu.matmul %22, %20, %cst_11 {dimension_numbers = #tpu.dot_dimension_numbers<[1], [0], [0], [1], [0, 0, 1, 1], [], []>} : vector<8x256xbf16>, vector<256x128xbf16>, vector<8x128xf32> -> vector<8x128xf32>
    %24 = arith.extf %21 : vector<1x128xbf16> to vector<1x128xf32>
    %25 = vector.broadcast %24 : vector<1x128xf32> to vector<8x128xf32>
    %26 = arith.addf %23, %25 : vector<8x128xf32>
    %c552 = arith.constant 552 : index
    %c0_12 = arith.constant 0 : index
    %27 = vector.load %arg3[%c552, %c0_12] : memref<896x384xbf16, #tpu.memory_space<vmem>>, vector<8x56xbf16>
    %cst_13 = arith.constant dense<0.000000e+00> : vector<8x56xf32>
    %28 = tpu.matmul %3, %27, %cst_13 {dimension_numbers = #tpu.dot_dimension_numbers<[1], [0], [0], [1], [0, 0, 1, 1], [], []>} : vector<8x8xbf16>, vector<8x56xbf16>, vector<8x56xf32> -> vector<8x56xf32>
    %29 = vector.extract_strided_slice %28 {offsets = [0, 0], sizes = [8, 28], strides = [1, 1]} : vector<8x56xf32> to vector<8x28xf32>
    %30 = vector.extract_strided_slice %28 {offsets = [0, 28], sizes = [8, 28], strides = [1, 1]} : vector<8x56xf32> to vector<8x28xf32>
    %31 = arith.mulf %29, %30 : vector<8x28xf32>
    %32 = vector.extract_strided_slice %26 {offsets = [0, 0], sizes = [8, 8], strides = [1, 1]} : vector<8x128xf32> to vector<8x8xf32>
    %33 = arith.mulf %32, %2 : vector<8x8xf32>
    %cst_14 = arith.constant dense<0.000000e+00> : vector<8xf32>
    %34 = vector.multi_reduction <add>, %33, %cst_14 [1] : vector<8x8xf32> to vector<8xf32>
    %35 = vector.shape_cast %34 : vector<8xf32> to vector<8x1xf32>
    %36 = vector.extract_strided_slice %26 {offsets = [0, 8], sizes = [8, 28], strides = [1, 1]} : vector<8x128xf32> to vector<8x28xf32>
    %37 = arith.mulf %36, %31 : vector<8x28xf32>
    %cst_15 = arith.constant dense<0.000000e+00> : vector<8xf32>
    %38 = vector.multi_reduction <add>, %37, %cst_15 [1] : vector<8x28xf32> to vector<8xf32>
    %39 = vector.shape_cast %38 : vector<8xf32> to vector<8x1xf32>
    %c560 = arith.constant 560 : index
    %c0_16 = arith.constant 0 : index
    %40 = vector.load %arg3[%c560, %c0_16] : memref<896x384xbf16, #tpu.memory_space<vmem>>, vector<28x128xbf16>
    %c592 = arith.constant 592 : index
    %c0_17 = arith.constant 0 : index
    %41 = vector.load %arg3[%c592, %c0_17] : memref<896x384xbf16, #tpu.memory_space<vmem>>, vector<1x128xbf16>
    %42 = vector.extract_strided_slice %10 {offsets = [0, 256], sizes = [8, 128], strides = [1, 1]} : vector<8x384xf32> to vector<8x128xf32>
    %43 = arith.truncf %31 : vector<8x28xf32> to vector<8x28xbf16>
    %cst_18 = arith.constant dense<0.000000e+00> : vector<8x128xf32>
    %44 = tpu.matmul %43, %40, %cst_18 {dimension_numbers = #tpu.dot_dimension_numbers<[1], [0], [0], [1], [0, 0, 1, 1], [], []>} : vector<8x28xbf16>, vector<28x128xbf16>, vector<8x128xf32> -> vector<8x128xf32>
    %45 = arith.extf %41 : vector<1x128xbf16> to vector<1x128xf32>
    %46 = vector.broadcast %45 : vector<1x128xf32> to vector<8x128xf32>
    %47 = arith.addf %44, %46 : vector<8x128xf32>
    %48 = math.tanh %47 : vector<8x128xf32>
    %49 = arith.addf %42, %48 : vector<8x128xf32>
    %c600 = arith.constant 600 : index
    %c0_19 = arith.constant 0 : index
    %50 = vector.load %arg3[%c600, %c0_19] : memref<896x384xbf16, #tpu.memory_space<vmem>>, vector<128x128xbf16>
    %c728 = arith.constant 728 : index
    %c0_20 = arith.constant 0 : index
    %51 = vector.load %arg3[%c728, %c0_20] : memref<896x384xbf16, #tpu.memory_space<vmem>>, vector<1x128xbf16>
    %52 = arith.truncf %49 : vector<8x128xf32> to vector<8x128xbf16>
    %cst_21 = arith.constant dense<0.000000e+00> : vector<8x128xf32>
    %53 = tpu.matmul %52, %50, %cst_21 {dimension_numbers = #tpu.dot_dimension_numbers<[1], [0], [0], [1], [0, 0, 1, 1], [], []>} : vector<8x128xbf16>, vector<128x128xbf16>, vector<8x128xf32> -> vector<8x128xf32>
    %54 = arith.extf %51 : vector<1x128xbf16> to vector<1x128xf32>
    %55 = vector.broadcast %54 : vector<1x128xf32> to vector<8x128xf32>
    %56 = arith.addf %53, %55 : vector<8x128xf32>
    %57 = math.tanh %56 : vector<8x128xf32>
    %c736 = arith.constant 736 : index
    %c0_22 = arith.constant 0 : index
    %58 = vector.load %arg3[%c736, %c0_22] : memref<896x384xbf16, #tpu.memory_space<vmem>>, vector<128x128xbf16>
    %c864 = arith.constant 864 : index
    %c0_23 = arith.constant 0 : index
    %59 = vector.load %arg3[%c864, %c0_23] : memref<896x384xbf16, #tpu.memory_space<vmem>>, vector<1x128xbf16>
    %60 = arith.truncf %57 : vector<8x128xf32> to vector<8x128xbf16>
    %cst_24 = arith.constant dense<0.000000e+00> : vector<8x128xf32>
    %61 = tpu.matmul %60, %58, %cst_24 {dimension_numbers = #tpu.dot_dimension_numbers<[1], [0], [0], [1], [0, 0, 1, 1], [], []>} : vector<8x128xbf16>, vector<128x128xbf16>, vector<8x128xf32> -> vector<8x128xf32>
    %62 = arith.extf %59 : vector<1x128xbf16> to vector<1x128xf32>
    %63 = vector.broadcast %62 : vector<1x128xf32> to vector<8x128xf32>
    %64 = arith.addf %61, %63 : vector<8x128xf32>
    %65 = math.tanh %64 : vector<8x128xf32>
    %c872 = arith.constant 872 : index
    %c0_25 = arith.constant 0 : index
    %66 = vector.load %arg3[%c872, %c0_25] : memref<896x384xbf16, #tpu.memory_space<vmem>>, vector<1x128xbf16>
    %67 = arith.extf %66 : vector<1x128xbf16> to vector<1x128xf32>
    %c880 = arith.constant 880 : index
    %c0_26 = arith.constant 0 : index
    %68 = vector.load %arg3[%c880, %c0_26] : memref<896x384xbf16, #tpu.memory_space<vmem>>, vector<1x8xbf16>
    %69 = arith.extf %68 : vector<1x8xbf16> to vector<1x8xf32>
    %70 = vector.broadcast %67 : vector<1x128xf32> to vector<8x128xf32>
    %71 = arith.mulf %65, %70 : vector<8x128xf32>
    %cst_27 = arith.constant dense<0.000000e+00> : vector<8xf32>
    %72 = vector.multi_reduction <add>, %71, %cst_27 [1] : vector<8x128xf32> to vector<8xf32>
    %73 = vector.shape_cast %72 : vector<8xf32> to vector<8x1xf32>
    %74 = vector.extract_strided_slice %69 {offsets = [0, 4], sizes = [1, 1], strides = [1, 1]} : vector<1x8xf32> to vector<1x1xf32>
    %75 = vector.broadcast %74 : vector<1x1xf32> to vector<8x1xf32>
    %76 = arith.addf %73, %75 : vector<8x1xf32>
    %77 = vector.extract_strided_slice %69 {offsets = [0, 0], sizes = [1, 1], strides = [1, 1]} : vector<1x8xf32> to vector<1x1xf32>
    %78 = vector.broadcast %77 : vector<1x1xf32> to vector<8x1xf32>
    %79 = arith.mulf %35, %78 : vector<8x1xf32>
    %80 = vector.extract_strided_slice %69 {offsets = [0, 1], sizes = [1, 1], strides = [1, 1]} : vector<1x8xf32> to vector<1x1xf32>
    %81 = vector.broadcast %80 : vector<1x1xf32> to vector<8x1xf32>
    %82 = arith.mulf %39, %81 : vector<8x1xf32>
    %83 = arith.addf %79, %82 : vector<8x1xf32>
    %84 = vector.extract_strided_slice %69 {offsets = [0, 2], sizes = [1, 1], strides = [1, 1]} : vector<1x8xf32> to vector<1x1xf32>
    %85 = vector.broadcast %84 : vector<1x1xf32> to vector<8x1xf32>
    %86 = arith.mulf %76, %85 : vector<8x1xf32>
    %87 = arith.addf %83, %86 : vector<8x1xf32>
    %88 = vector.extract_strided_slice %69 {offsets = [0, 3], sizes = [1, 1], strides = [1, 1]} : vector<1x8xf32> to vector<1x1xf32>
    %89 = vector.broadcast %88 : vector<1x1xf32> to vector<8x1xf32>
    %90 = arith.addf %87, %89 : vector<8x1xf32>
    %c0_28 = arith.constant 0 : index
    %c0_29 = arith.constant 0 : index
    %91 = vector.load %arg4[%c0_28, %c0_29] : memref<8x1xf32, #tpu.memory_space<vmem>>, vector<8x1xf32>
    tpu.vector_store %arg4[%c0_28, %c0_29], %90 {strides = array<i32>} : memref<8x1xf32, #tpu.memory_space<vmem>>, vector<8x1xf32>,
    return
  }
  func.func @transform_0(%arg0: i32) -> (i32, i32) {
    %c0_i32 = arith.constant 0 : i32
    %c0_i32_0 = arith.constant 0 : i32
    return %arg0, %c0_i32 : i32, i32
  }
  func.func @transform_1(%arg0: i32) -> (i32, i32) {
    %c0_i32 = arith.constant 0 : i32
    %c0_i32_0 = arith.constant 0 : i32
    return %arg0, %c0_i32 : i32, i32
  }
  func.func @transform_2(%arg0: i32) -> (i32, i32) {
    %c0_i32 = arith.constant 0 : i32
    %c0_i32_0 = arith.constant 0 : i32
    %c0_i32_1 = arith.constant 0 : i32
    return %c0_i32, %c0_i32_0 : i32, i32
  }
  func.func @transform_3(%arg0: i32) -> (i32, i32) {
    %c0_i32 = arith.constant 0 : i32
    %c0_i32_0 = arith.constant 0 : i32
    return %arg0, %c0_i32 : i32, i32
  }
}

</mosaic_0001>

<llo_original>
// kernel: tpu_custom_call.1
$region0: #{tpu_custom_call.1}
  #allocation0 [shape = 'u32[]', space=smem, size = 0x4, offset = 0x4, fixed_abs, tag = 'smem constant byte address 0x4 - core index']
  #allocation1 [shape = 'u32[144,128]{1,0:T(1,128)}', space=vmem, size = 0x12000, scoped, tag = 'internal scratch']
  %s0 = inlined_call_operand.hbm [shape: f32[8,16], index: 0, kind: input, shape index: {}]
  %s1 = inlined_call_operand.hbm [shape: f32[8,8], index: 1, kind: input, shape index: {}]
  %s2 = inlined_call_operand.hbm [shape: bf16[896,384], index: 2, kind: input, shape index: {}]
  %s3 = inlined_call_operand.vmem [shape: f32[8,1], index: 3, kind: output, shape index: {}]
  %s4 = sld [smem:[#allocation0]]
  $region34: #{tpu_custom_call.1} parent=0
    _
  %s6 = ssub.s32 1, %s4
  %s7 = scalar_select 0, %s6, %s4
  $region1: #{tpu_custom_call.1} parent=0
    #allocation2 [shape = 'u8[4096]{0}', space=vmem, size = 0x1000, scoped, tag = 'input window, operand 0, single buffered']
    #allocation3 [shape = 's32[1]{0}', space=sflag, size = 0x4, scoped, tag = 'scoped memory for tpu_custom_call.1']
    #allocation4 [shape = 'u8[4096]{0}', space=vmem, size = 0x1000, scoped, tag = 'input window, operand 1, single buffered']
    #allocation5 [shape = 's32[1]{0}', space=sflag, size = 0x4, scoped, tag = 'scoped memory for tpu_custom_call.1']
    #allocation6 [shape = 'u8[688128]{0}', space=vmem, size = 0xa8000, scoped, tag = 'input window, operand 2, single buffered']
    %8 = vsyncpa [#allocation3], 0
    %9 = vsyncpa [#allocation5], 0
    // Predicated region
    $region2: #{tpu_custom_call.1} parent=1 // pred_check
      _
    $region3: #{tpu_custom_call.1} parent=1 // pred_check_branch
      %11 = sbr.rel (0) target = $region5
    $region4: #{tpu_custom_call.1} parent=1 // pred_region
      %s13 = ssub.s32 128, 128
      %14 = vsyncadd [#allocation3], %s13
      %s16 = sshll.u32 [#allocation2], 4
      %s17 = int_to_ptr.vmem [resolvable:$true] %s16
      %19 = dma.hbm_to_vmem [thread:$0]  %s0, 128, %s17, [#allocation3]
    $region5: #{tpu_custom_call.1} parent=1 // pred_fallthru
      _
    // Predicated region
    $region6: #{tpu_custom_call.1} parent=1 // pred_check
      _
    $region7: #{tpu_custom_call.1} parent=1 // pred_check_branch
      %21 = sbr.rel (0) target = $region9
    $region8: #{tpu_custom_call.1} parent=1 // pred_region
      %s23 = ssub.s32 128, 128
      %24 = vsyncadd [#allocation5], %s23
      %s26 = sshll.u32 [#allocation4], 4
      %s27 = int_to_ptr.vmem [resolvable:$true] %s26
      %29 = dma.hbm_to_vmem [thread:$0]  %s1, 128, %s27, [#allocation5]
    $region9: #{tpu_custom_call.1} parent=1 // pred_fallthru
      _
    // Predicated region
    $region10: #{tpu_custom_call.1} parent=1 // pred_check
      _
    $region11: #{tpu_custom_call.1} parent=1 // pred_check_branch
      %31 = sbr.rel (0) target = $region13
    $region12: #{tpu_custom_call.1} parent=1 // pred_region
      %s33 = ssub.s32 21504, 21504
      %34 = vsyncadd [#allocation5], %s33
      %s35 = sshll.u32 [#allocation6], 4
      %s36 = int_to_ptr.vmem [resolvable:$true] %s35
      %41 = dma.hbm_to_vmem [thread:$0]  %s2, 21504, %s36, [#allocation5], 192, 192, 12
    $region13: #{tpu_custom_call.1} parent=1 // pred_fallthru
      _
    // Predicated region
    $region14: #{tpu_custom_call.1} parent=1 // pred_check
      _
    $region15: #{tpu_custom_call.1} parent=1 // pred_check_branch
      %43 = sbr.rel (0) target = $region17
    $region16: #{tpu_custom_call.1} parent=1 // pred_region
      %44 = dma.done [#allocation3], 128
    $region17: #{tpu_custom_call.1} parent=1 // pred_fallthru
      _
    // Predicated region
    $region18: #{tpu_custom_call.1} parent=1 // pred_check
      _
    $region19: #{tpu_custom_call.1} parent=1 // pred_check_branch
      %46 = sbr.rel (0) target = $region21
    $region20: #{tpu_custom_call.1} parent=1 // pred_region
      %47 = dma.done [#allocation5], 128
    $region21: #{tpu_custom_call.1} parent=1 // pred_fallthru
      _
    // Predicated region
    $region22: #{tpu_custom_call.1} parent=1 // pred_check
      _
    $region23: #{tpu_custom_call.1} parent=1 // pred_check_branch
      %49 = sbr.rel (0) target = $region25
    $region24: #{tpu_custom_call.1} parent=1 // pred_region
      %50 = dma.done [#allocation5], 21504
    $region25: #{tpu_custom_call.1} parent=1 // pred_fallthru
      _
    %v52 = vld [vmem:[#allocation2] sm:$0xff]
    %v53 = vpack.c.bf16 %v52, %v52
    %v54 = vld [vmem:[#allocation4] sm:$0xff]
    %v55 = vpack.c.bf16 %v54, %v54
    %v56 = vld [vmem:[#allocation6] sm:$0xff]
    %v57 = vld [vmem:[#allocation6 + $0x8] sm:$0xf]
    %v58 = vld [vmem:[#allocation6 + $0xc] sm:$0xff]
    %v59 = vld [vmem:[#allocation6 + $0x14] sm:$0xf]
    %v60 = vld [vmem:[#allocation6 + $0x18] sm:$0x11]
    %v61 = vld [vmem:[#allocation6 + $0x20] sm:$0x1]
    %v62 = vunpack.c.l.bf16 %v60
    %v63 = vunpack.c.h.bf16 %v60
    %v64 = vunpack.c.l.bf16 %v61
    %v65 = vlaneseq
    %v66 = vshrl.u32 %v65, 7
    %v67 = vsub.s32 0, %v66
    %v68 = vrot.slane %v62, %v67
    %v69 = vlaneseq
    %v70 = vshrl.u32 %v69, 7
    %v71 = vsub.s32 0, %v70
    %v72 = vrot.slane %v63, %v71
    %v73 = vlaneseq
    %v74 = vshrl.u32 %v73, 7
    %v75 = vsub.s32 0, %v74
    %v76 = vrot.slane %v64, %v75
    %v81 = vunpack.c.l.b16 %v56
    %v82 = vunpack.c.h.b16 %v56
    %v83 = vunpack.c.l.b16 %v57
    %v84 = vunpack.c.l.b16 %v58
    %v85 = vunpack.c.h.b16 %v58
    %v86 = vunpack.c.l.b16 %v59
    %v87 = vpack.c.b16 %v84, %v81
    %v88 = vpack.c.b16 %v85, %v82
    %v89 = vpack.c.b16 %v86, %v83
    %vm93 = vcmask 130048
    %v95 = vsel %vm93, %v53, 0
    %97 = vmatprep.subr.bf16.mxu0 0
    %98 = vmatpush1.bf16.msra.mxu0 0
    %99 = vmatprep.subr.bf16.mxu0 0
    %100 = vmatpush1.bf16.msra.mxu0 0
    %101 = vmatprep.subr.bf16.mxu0 0
    %102 = vmatpush1.bf16.msra.mxu0 0
    %103 = vmatprep.subr.bf16.mxu0 0
    %104 = vmatpush1.bf16.msra.mxu0 0
    %105 = vmatprep.subr.bf16.mxu0 0
    %106 = vmatpush1.bf16.msra.mxu0 0
    %107 = vmatprep.subr.bf16.mxu0 0
    %108 = vmatpush1.bf16.msra.mxu0 0
    %109 = vmatprep.subr.bf16.mxu0 0
    %110 = vmatpush1.bf16.msra.mxu0 0
    %111 = vmatprep.subr.bf16.mxu0 %v88
    %112 = vmatpush1.bf16.msra.mxu0 %v87
    %113 = vmatprep.subr.bf16.mxu0 0
    %114 = vmatpush2.bf16.msra.mxu0 0
    %115 = vmatprep.subr.bf16.mxu0 0
    %116 = vmatpush2.bf16.msra.mxu0 0
    %117 = vmatprep.subr.bf16.mxu0 0
    %118 = vmatpush2.bf16.msra.mxu0 0
    %119 = vmatprep.subr.bf16.mxu0 0
    %120 = vmatpush2.bf16.msra.mxu0 0
    %121 = vmatprep.subr.bf16.mxu0 0
    %122 = vmatpush2.bf16.msra.mxu0 0
    %123 = vmatprep.subr.bf16.mxu0 0
    %124 = vmatpush2.bf16.msra.mxu0 0
    %125 = vmatprep.subr.bf16.mxu0 0
    %126 = vmatpush2.bf16.msra.mxu0 0
    %127 = vmatprep.subr.bf16.mxu0 0
    %128 = vmatpush2.bf16.msra.mxu0 0
    %129 = vmatprep.mubr.bf16.mxu0 0
    %130 = vmatmul.mubr.bf16.gmra.mxu0 %v95
    %v131 = vpop.f32.mrf.mxu0
    %v132 = vadd.f32 %v68, %v131
    %v133 = vpop.f32.mrf.mxu0
    %v134 = vadd.f32 %v72, %v133
    %v135 = vpop.f32.mrf.mxu0
    %v136 = vpop.f32.mrf.mxu0
    %137 = vdwg.mxu0
    %138 = vmatprep.subr.bf16.mxu0 0
    %139 = vmatpush1.bf16.msra.mxu0 0
    %140 = vmatprep.subr.bf16.mxu0 0
    %141 = vmatpush1.bf16.msra.mxu0 0
    %142 = vmatprep.subr.bf16.mxu0 0
    %143 = vmatpush1.bf16.msra.mxu0 0
    %144 = vmatprep.subr.bf16.mxu0 0
    %145 = vmatpush1.bf16.msra.mxu0 0
    %146 = vmatprep.subr.bf16.mxu0 0
    %147 = vmatpush1.bf16.msra.mxu0 0
    %148 = vmatprep.subr.bf16.mxu0 0
    %149 = vmatpush1.bf16.msra.mxu0 0
    %150 = vmatprep.subr.bf16.mxu0 0
    %151 = vmatpush1.bf16.msra.mxu0 0
    %152 = vmatprep.subr.bf16.mxu0 0
    %153 = vmatpush1.bf16.msra.mxu0 %v89
    %154 = vmatprep.subr.bf16.mxu0 0
    %155 = vmatpush2.bf16.msra.mxu0 0
    %156 = vmatprep.subr.bf16.mxu0 0
    %157 = vmatpush2.bf16.msra.mxu0 0
    %158 = vmatprep.subr.bf16.mxu0 0
    %159 = vmatpush2.bf16.msra.mxu0 0
    %160 = vmatprep.subr.bf16.mxu0 0
    %161 = vmatpush2.bf16.msra.mxu0 0
    %162 = vmatprep.subr.bf16.mxu0 0
    %163 = vmatpush2.bf16.msra.mxu0 0
    %164 = vmatprep.subr.bf16.mxu0 0
    %165 = vmatpush2.bf16.msra.mxu0 0
    %166 = vmatprep.subr.bf16.mxu0 0
    %167 = vmatpush2.bf16.msra.mxu0 0
    %168 = vmatprep.subr.bf16.mxu0 0
    %169 = vmatpush2.bf16.msra.mxu0 0
    %170 = vmatprep.mubr.bf16.mxu0 0
    %171 = vmatmul.mubr.bf16.gmra.mxu0 %v95
    %v172 = vpop.f32.mrf.mxu0
    %v173 = vadd.f32 %v76, %v172
    %v174 = vpop.f32.mrf.mxu0
    %v175 = vpop.f32.mrf.mxu0
    %v176 = vpop.f32.mrf.mxu0
    %177 = vdwg.mxu0
    %v178 = vtanh.pop %v132
    %v179 = vtanh.pop %v134
    %v180 = vtanh.pop %v173
    %v181 = vld [vmem:[#allocation6 + $0x24] sm:$0xff]
    %v182 = vld [vmem:[#allocation6 + $0x30] sm:$0xff]
    %v183 = vld [vmem:[#allocation6 + $0x3c] sm:$0xff]
    %v184 = vld [vmem:[#allocation6 + $0x48] sm:$0xff]
    %v185 = vld [vmem:[#allocation6 + $0x54] sm:$0xff]
    %v186 = vld [vmem:[#allocation6 + $0x60] sm:$0xff]
    %v187 = vld [vmem:[#allocation6 + $0x6c] sm:$0xff]
    %v188 = vld [vmem:[#allocation6 + $0x78] sm:$0xff]
    %v189 = vld [vmem:[#allocation6 + $0x84] sm:$0xff]
    %v190 = vld [vmem:[#allocation6 + $0x90] sm:$0xff]
    %v191 = vld [vmem:[#allocation6 + $0x9c] sm:$0xff]
    %v192 = vld [vmem:[#allocation6 + $0xa8] sm:$0xff]
    %v193 = vld [vmem:[#allocation6 + $0xb4] sm:$0xff]
    %v194 = vld [vmem:[#allocation6 + $0xc0] sm:$0xff]
    %v195 = vld [vmem:[#allocation6 + $0xcc] sm:$0xff]
    %v196 = vld [vmem:[#allocation6 + $0xd8] sm:$0xff]
    %v197 = vld [vmem:[#allocation6 + $0xe4] sm:$0xff]
    %v198 = vld [vmem:[#allocation6 + $0xf0] sm:$0xff]
    %v199 = vld [vmem:[#allocation6 + $0xfc] sm:$0xff]
    %v200 = vld [vmem:[#allocation6 + $0x108] sm:$0xff]
    %v201 = vld [vmem:[#allocation6 + $0x114] sm:$0xff]
    %v202 = vld [vmem:[#allocation6 + $0x120] sm:$0xff]
    %v203 = vld [vmem:[#allocation6 + $0x12c] sm:$0xff]
    %v204 = vld [vmem:[#allocation6 + $0x138] sm:$0xff]
    %v205 = vld [vmem:[#allocation6 + $0x144] sm:$0xff]
    %v206 = vld [vmem:[#allocation6 + $0x150] sm:$0xff]
    %v207 = vld [vmem:[#allocation6 + $0x15c] sm:$0xff]
    %v208 = vld [vmem:[#allocation6 + $0x168] sm:$0xff]
    %v209 = vld [vmem:[#allocation6 + $0x174] sm:$0xff]
    %v210 = vld [vmem:[#allocation6 + $0x180] sm:$0xff]
    %v211 = vld [vmem:[#allocation6 + $0x18c] sm:$0xff]
    %v212 = vld [vmem:[#allocation6 + $0x198] sm:$0xff]
    %v213 = vld [vmem:[#allocation6 + $0x1a4] sm:$0x11]
    %v214 = vpack.c.bf16 %v178, %v178
    %v215 = vpack.c.bf16 %v179, %v179
    %v216 = vunpack.c.l.bf16 %v213
    %v217 = vunpack.c.h.bf16 %v213
    %v218 = vlaneseq
    %v219 = vshrl.u32 %v218, 7
    %v220 = vsub.s32 0, %v219
    %v221 = vrot.slane %v216, %v220
    %v222 = vlaneseq
    %v223 = vshrl.u32 %v222, 7
    %v224 = vsub.s32 0, %v223
    %v225 = vrot.slane %v217, %v224
    %v258 = vunpack.c.l.b16 %v181
    %v259 = vunpack.c.h.b16 %v181
    %v260 = vunpack.c.l.b16 %v182
    %v261 = vunpack.c.h.b16 %v182
    %v262 = vunpack.c.l.b16 %v183
    %v263 = vunpack.c.h.b16 %v183
    %v264 = vunpack.c.l.b16 %v184
    %v265 = vunpack.c.h.b16 %v184
    %v266 = vunpack.c.l.b16 %v185
    %v267 = vunpack.c.h.b16 %v185
    %v268 = vunpack.c.l.b16 %v186
    %v269 = vunpack.c.h.b16 %v186
    %v270 = vunpack.c.l.b16 %v187
    %v271 = vunpack.c.h.b16 %v187
    %v272 = vunpack.c.l.b16 %v188
    %v273 = vunpack.c.h.b16 %v188
    %v274 = vunpack.c.l.b16 %v189
    %v275 = vunpack.c.h.b16 %v189
    %v276 = vunpack.c.l.b16 %v190
    %v277 = vunpack.c.h.b16 %v190
    %v278 = vunpack.c.l.b16 %v191
    %v279 = vunpack.c.h.b16 %v191
    %v280 = vunpack.c.l.b16 %v192
    %v281 = vunpack.c.h.b16 %v192
    %v282 = vunpack.c.l.b16 %v193
    %v283 = vunpack.c.h.b16 %v193
    %v284 = vunpack.c.l.b16 %v194
    %v285 = vunpack.c.h.b16 %v194
    %v286 = vunpack.c.l.b16 %v195
    %v287 = vunpack.c.h.b16 %v195
    %v288 = vunpack.c.l.b16 %v196
    %v289 = vunpack.c.h.b16 %v196
    %v290 = vunpack.c.l.b16 %v197
    %v291 = vunpack.c.h.b16 %v197
    %v292 = vunpack.c.l.b16 %v198
    %v293 = vunpack.c.h.b16 %v198
    %v294 = vunpack.c.l.b16 %v199
    %v295 = vunpack.c.h.b16 %v199
    %v296 = vunpack.c.l.b16 %v200
    %v297 = vunpack.c.h.b16 %v200
    %v298 = vunpack.c.l.b16 %v201
    %v299 = vunpack.c.h.b16 %v201
    %v300 = vunpack.c.l.b16 %v202
    %v301 = vunpack.c.h.b16 %v202
    %v302 = vunpack.c.l.b16 %v203
    %v303 = vunpack.c.h.b16 %v203
    %v304 = vunpack.c.l.b16 %v204
    %v305 = vunpack.c.h.b16 %v204
    %v306 = vunpack.c.l.b16 %v205
    %v307 = vunpack.c.h.b16 %v205
    %v308 = vunpack.c.l.b16 %v206
    %v309 = vunpack.c.h.b16 %v206
    %v310 = vunpack.c.l.b16 %v207
    %v311 = vunpack.c.h.b16 %v207
    %v312 = vunpack.c.l.b16 %v208
    %v313 = vunpack.c.h.b16 %v208
    %v314 = vunpack.c.l.b16 %v209
    %v315 = vunpack.c.h.b16 %v209
    %v316 = vunpack.c.l.b16 %v210
    %v317 = vunpack.c.h.b16 %v210
    %v318 = vunpack.c.l.b16 %v211
    %v319 = vunpack.c.h.b16 %v211
    %v320 = vunpack.c.l.b16 %v212
    %v321 = vunpack.c.h.b16 %v212
    %v322 = vpack.c.b16 %v260, %v258
    %v323 = vpack.c.b16 %v261, %v259
    %v324 = vpack.c.b16 %v264, %v262
    %v325 = vpack.c.b16 %v265, %v263
    %v326 = vpack.c.b16 %v268, %v266
    %v327 = vpack.c.b16 %v269, %v267
    %v328 = vpack.c.b16 %v272, %v270
    %v329 = vpack.c.b16 %v273, %v271
    %v330 = vpack.c.b16 %v276, %v274
    %v331 = vpack.c.b16 %v277, %v275
    %v332 = vpack.c.b16 %v280, %v278
    %v333 = vpack.c.b16 %v281, %v279
    %v334 = vpack.c.b16 %v284, %v282
    %v335 = vpack.c.b16 %v285, %v283
    %v336 = vpack.c.b16 %v288, %v286
    %v337 = vpack.c.b16 %v289, %v287
    %v338 = vpack.c.b16 %v292, %v290
    %v339 = vpack.c.b16 %v293, %v291
    %v340 = vpack.c.b16 %v296, %v294
    %v341 = vpack.c.b16 %v297, %v295
    %v342 = vpack.c.b16 %v300, %v298
    %v343 = vpack.c.b16 %v301, %v299
    %v344 = vpack.c.b16 %v304, %v302
    %v345 = vpack.c.b16 %v305, %v303
    %v346 = vpack.c.b16 %v308, %v306
    %v347 = vpack.c.b16 %v309, %v307
    %v348 = vpack.c.b16 %v312, %v310
    %v349 = vpack.c.b16 %v313, %v311
    %v350 = vpack.c.b16 %v316, %v314
    %v351 = vpack.c.b16 %v317, %v315
    %v352 = vpack.c.b16 %v320, %v318
    %v353 = vpack.c.b16 %v321, %v319
    %386 = vmatprep.subr.bf16.mxu0 %v337
    %387 = vmatpush1.bf16.msra.mxu0 %v336
    %388 = vmatprep.subr.bf16.mxu0 %v335
    %389 = vmatpush1.bf16.msra.mxu0 %v334
    %390 = vmatprep.subr.bf16.mxu0 %v333
    %391 = vmatpush1.bf16.msra.mxu0 %v332
    %392 = vmatprep.subr.bf16.mxu0 %v331
    %393 = vmatpush1.bf16.msra.mxu0 %v330
    %394 = vmatprep.subr.bf16.mxu0 %v329
    %395 = vmatpush1.bf16.msra.mxu0 %v328
    %396 = vmatprep.subr.bf16.mxu0 %v327
    %397 = vmatpush1.bf16.msra.mxu0 %v326
    %398 = vmatprep.subr.bf16.mxu0 %v325
    %399 = vmatpush1.bf16.msra.mxu0 %v324
    %400 = vmatprep.subr.bf16.mxu0 %v323
    %401 = vmatpush1.bf16.msra.mxu0 %v322
    %402 = vmatprep.subr.bf16.mxu0 %v353
    %403 = vmatpush2.bf16.msra.mxu0 %v352
    %404 = vmatprep.subr.bf16.mxu0 %v351
    %405 = vmatpush2.bf16.msra.mxu0 %v350
    %406 = vmatprep.subr.bf16.mxu0 %v349
    %407 = vmatpush2.bf16.msra.mxu0 %v348
    %408 = vmatprep.subr.bf16.mxu0 %v347
    %409 = vmatpush2.bf16.msra.mxu0 %v346
    %410 = vmatprep.subr.bf16.mxu0 %v345
    %411 = vmatpush2.bf16.msra.mxu0 %v344
    %412 = vmatprep.subr.bf16.mxu0 %v343
    %413 = vmatpush2.bf16.msra.mxu0 %v342
    %414 = vmatprep.subr.bf16.mxu0 %v341
    %415 = vmatpush2.bf16.msra.mxu0 %v340
    %416 = vmatprep.subr.bf16.mxu0 %v339
    %417 = vmatpush2.bf16.msra.mxu0 %v338
    %418 = vmatprep.mubr.bf16.mxu0 %v215
    %419 = vmatmul.mubr.bf16.gmra.mxu0 %v214
    %v420 = vpop.f32.mrf.mxu0
    %v421 = vadd.f32 %v221, %v420
    %v422 = vpop.f32.mrf.mxu0
    %v423 = vadd.f32 %v225, %v422
    %v424 = vpop.f32.mrf.mxu0
    %v425 = vpop.f32.mrf.mxu0
    %426 = vdwg.mxu0
    %v427 = vtanh.pop %v421
    %v428 = vtanh.pop %v423
    %v429 = vld [vmem:[#allocation6 + $0x1b0] sm:$0xf]
    %v430 = vld [vmem:[#allocation6 + $0x1bc] sm:$0xf]
    %v431 = vld [vmem:[#allocation6 + $0x1c8] sm:$0xf]
    %v432 = vld [vmem:[#allocation6 + $0x1d4] sm:$0xf]
    %v433 = vld [vmem:[#allocation6 + $0x1e0] sm:$0xf]
    %v434 = vld [vmem:[#allocation6 + $0x1ec] sm:$0xf]
    %v435 = vld [vmem:[#allocation6 + $0x1f8] sm:$0xf]
    %v436 = vld [vmem:[#allocation6 + $0x204] sm:$0xf]
    %v437 = vld [vmem:[#allocation6 + $0x210] sm:$0xf]
    %v438 = vld [vmem:[#allocation6 + $0x21c] sm:$0xf]
    %v439 = vld [vmem:[#allocation6 + $0x228] sm:$0xf]
    %v440 = vld [vmem:[#allocation6 + $0x234] sm:$0xf]
    %v441 = vld [vmem:[#allocation6 + $0x240] sm:$0xf]
    %v442 = vld [vmem:[#allocation6 + $0x24c] sm:$0xf]
    %v443 = vld [vmem:[#allocation6 + $0x258] sm:$0xf]
    %v444 = vld [vmem:[#allocation6 + $0x264] sm:$0xf]
    %v445 = vld [vmem:[#allocation6 + $0x270] sm:$0xf]
    %v446 = vld [vmem:[#allocation6 + $0x27c] sm:$0xf]
    %v447 = vld [vmem:[#allocation6 + $0x288] sm:$0xf]
    %v448 = vld [vmem:[#allocation6 + $0x294] sm:$0xf]
    %v449 = vld [vmem:[#allocation6 + $0x2a0] sm:$0xf]
    %v450 = vld [vmem:[#allocation6 + $0x2ac] sm:$0xf]
    %v451 = vld [vmem:[#allocation6 + $0x2b8] sm:$0xf]
    %v452 = vld [vmem:[#allocation6 + $0x2c4] sm:$0xf]
    %v453 = vld [vmem:[#allocation6 + $0x2d0] sm:$0xf]
    %v454 = vld [vmem:[#allocation6 + $0x2dc] sm:$0xf]
    %v455 = vld [vmem:[#allocation6 + $0x2e8] sm:$0xf]
    %v456 = vld [vmem:[#allocation6 + $0x2f4] sm:$0xf]
    %v457 = vld [vmem:[#allocation6 + $0x300] sm:$0xf]
    %v458 = vld [vmem:[#allocation6 + $0x30c] sm:$0xf]
    %v459 = vld [vmem:[#allocation6 + $0x318] sm:$0xf]
    %v460 = vld [vmem:[#allocation6 + $0x324] sm:$0xf]
    %v461 = vld [vmem:[#allocation6 + $0x330] sm:$0x1]
    %v462 = vpack.c.bf16 %v427, %v427
    %v463 = vpack.c.bf16 %v428, %v428
    %v464 = vunpack.c.l.bf16 %v461
    %v465 = vlaneseq
    %v466 = vshrl.u32 %v465, 7
    %v467 = vsub.s32 0, %v466
    %v468 = vrot.slane %v464, %v467
    %v501 = vunpack.c.l.b16 %v429
    %v502 = vunpack.c.l.b16 %v430
    %v503 = vunpack.c.l.b16 %v431
    %v504 = vunpack.c.l.b16 %v432
    %v505 = vunpack.c.l.b16 %v433
    %v506 = vunpack.c.l.b16 %v434
    %v507 = vunpack.c.l.b16 %v435
    %v508 = vunpack.c.l.b16 %v436
    %v509 = vunpack.c.l.b16 %v437
    %v510 = vunpack.c.l.b16 %v438
    %v511 = vunpack.c.l.b16 %v439
    %v512 = vunpack.c.l.b16 %v440
    %v513 = vunpack.c.l.b16 %v441
    %v514 = vunpack.c.l.b16 %v442
    %v515 = vunpack.c.l.b16 %v443
    %v516 = vunpack.c.l.b16 %v444
    %v517 = vunpack.c.l.b16 %v445
    %v518 = vunpack.c.l.b16 %v446
    %v519 = vunpack.c.l.b16 %v447
    %v520 = vunpack.c.l.b16 %v448
    %v521 = vunpack.c.l.b16 %v449
    %v522 = vunpack.c.l.b16 %v450
    %v523 = vunpack.c.l.b16 %v451
    %v524 = vunpack.c.l.b16 %v452
    %v525 = vunpack.c.l.b16 %v453
    %v526 = vunpack.c.l.b16 %v454
    %v527 = vunpack.c.l.b16 %v455
    %v528 = vunpack.c.l.b16 %v456
    %v529 = vunpack.c.l.b16 %v457
    %v530 = vunpack.c.l.b16 %v458
    %v531 = vunpack.c.l.b16 %v459
    %v532 = vunpack.c.l.b16 %v460
    %v533 = vpack.c.b16 %v502, %v501
    %v534 = vpack.c.b16 %v504, %v503
    %v535 = vpack.c.b16 %v506, %v505
    %v536 = vpack.c.b16 %v508, %v507
    %v537 = vpack.c.b16 %v510, %v509
    %v538 = vpack.c.b16 %v512, %v511
    %v539 = vpack.c.b16 %v514, %v513
    %v540 = vpack.c.b16 %v516, %v515
    %v541 = vpack.c.b16 %v518, %v517
    %v542 = vpack.c.b16 %v520, %v519
    %v543 = vpack.c.b16 %v522, %v521
    %v544 = vpack.c.b16 %v524, %v523
    %v545 = vpack.c.b16 %v526, %v525
    %v546 = vpack.c.b16 %v528, %v527
    %v547 = vpack.c.b16 %v530, %v529
    %v548 = vpack.c.b16 %v532, %v531
    %565 = vmatprep.subr.bf16.mxu0 0
    %566 = vmatpush1.bf16.msra.mxu0 %v540
    %567 = vmatprep.subr.bf16.mxu0 0
    %568 = vmatpush1.bf16.msra.mxu0 %v539
    %569 = vmatprep.subr.bf16.mxu0 0
    %570 = vmatpush1.bf16.msra.mxu0 %v538
    %571 = vmatprep.subr.bf16.mxu0 0
    %572 = vmatpush1.bf16.msra.mxu0 %v537
    %573 = vmatprep.subr.bf16.mxu0 0
    %574 = vmatpush1.bf16.msra.mxu0 %v536
    %575 = vmatprep.subr.bf16.mxu0 0
    %576 = vmatpush1.bf16.msra.mxu0 %v535
    %577 = vmatprep.subr.bf16.mxu0 0
    %578 = vmatpush1.bf16.msra.mxu0 %v534
    %579 = vmatprep.subr.bf16.mxu0 0
    %580 = vmatpush1.bf16.msra.mxu0 %v533
    %581 = vmatprep.subr.bf16.mxu0 0
    %582 = vmatpush2.bf16.msra.mxu0 %v548
    %583 = vmatprep.subr.bf16.mxu0 0
    %584 = vmatpush2.bf16.msra.mxu0 %v547
    %585 = vmatprep.subr.bf16.mxu0 0
    %586 = vmatpush2.bf16.msra.mxu0 %v546
    %587 = vmatprep.subr.bf16.mxu0 0
    %588 = vmatpush2.bf16.msra.mxu0 %v545
    %589 = vmatprep.subr.bf16.mxu0 0
    %590 = vmatpush2.bf16.msra.mxu0 %v544
    %591 = vmatprep.subr.bf16.mxu0 0
    %592 = vmatpush2.bf16.msra.mxu0 %v543
    %593 = vmatprep.subr.bf16.mxu0 0
    %594 = vmatpush2.bf16.msra.mxu0 %v542
    %595 = vmatprep.subr.bf16.mxu0 0
    %596 = vmatpush2.bf16.msra.mxu0 %v541
    %597 = vmatprep.mubr.bf16.mxu0 %v463
    %598 = vmatmul.mubr.bf16.gmra.mxu0 %v462
    %v599 = vpop.f32.mrf.mxu0
    %v600 = vadd.f32 %v468, %v599
    %v601 = vpop.f32.mrf.mxu0
    %v602 = vpop.f32.mrf.mxu0
    %v603 = vpop.f32.mrf.mxu0
    %604 = vdwg.mxu0
    %v605 = vld [vmem:[#allocation6 + $0x33c] sm:$0xf]
    %vm606 = vcmask 64512
    %v608 = vsel %vm606, %v55, 0
    %vm610 = vcmask 1043456
    %v612 = vsel %vm610, %v605, 0
    %614 = vmatprep.subr.bf16.mxu0 0
    %615 = vmatpush1.bf16.msra.mxu0 0
    %616 = vmatprep.subr.bf16.mxu0 0
    %617 = vmatpush1.bf16.msra.mxu0 0
    %618 = vmatprep.subr.bf16.mxu0 0
    %619 = vmatpush1.bf16.msra.mxu0 0
    %620 = vmatprep.subr.bf16.mxu0 0
    %621 = vmatpush1.bf16.msra.mxu0 0
    %622 = vmatprep.subr.bf16.mxu0 0
    %623 = vmatpush1.bf16.msra.mxu0 0
    %624 = vmatprep.subr.bf16.mxu0 0
    %625 = vmatpush1.bf16.msra.mxu0 0
    %626 = vmatprep.subr.bf16.mxu0 0
    %627 = vmatpush1.bf16.msra.mxu0 0
    %628 = vmatprep.subr.bf16.mxu0 0
    %629 = vmatpush1.bf16.msra.mxu0 %v612
    %630 = vmatprep.subr.bf16.mxu0 0
    %631 = vmatpush2.bf16.msra.mxu0 0
    %632 = vmatprep.subr.bf16.mxu0 0
    %633 = vmatpush2.bf16.msra.mxu0 0
    %634 = vmatprep.subr.bf16.mxu0 0
    %635 = vmatpush2.bf16.msra.mxu0 0
    %636 = vmatprep.subr.bf16.mxu0 0
    %637 = vmatpush2.bf16.msra.mxu0 0
    %638 = vmatprep.subr.bf16.mxu0 0
    %639 = vmatpush2.bf16.msra.mxu0 0
    %640 = vmatprep.subr.bf16.mxu0 0
    %641 = vmatpush2.bf16.msra.mxu0 0
    %642 = vmatprep.subr.bf16.mxu0 0
    %643 = vmatpush2.bf16.msra.mxu0 0
    %644 = vmatprep.subr.bf16.mxu0 0
    %645 = vmatpush2.bf16.msra.mxu0 0
    %646 = vmatprep.mubr.bf16.mxu0 0
    %647 = vmatmul.mubr.bf16.gmra.mxu0 %v608
    %v648 = vpop.f32.mrf.mxu0
    %v649 = vadd.f32 0.0, %v648
    %v650 = vpop.f32.mrf.mxu0
    %v651 = vpop.f32.mrf.mxu0
    %v652 = vpop.f32.mrf.mxu0
    %653 = vdwg.mxu0
    %655 = vrot.lane.b32.xlu0 %v649, 100
    %v656 = vpop.permute.xlu0 %655
    %v658 = vmul.f32 %v649, %v656
    %v659 = vmul.f32 %v600, %v54
    %v660 = vsel %vm606, %v659, 0.0
    %661 = vadd.xlane.f32.xlu0 %v660
    %v662 = vpop.xlane.xlu0 %661
    %664 = vrot.lane.b32.xlu0 %v658, 8
    %v665 = vpop.permute.xlu0 %664
    %v667 = vmul.f32 %v600, %v665
    %669 = vrot.lane.b32.xlu0 %v667, 120
    %v670 = vpop.permute.xlu0 %669
    %vm672 = vcmask 228352
    %v673 = vsel %vm672, %v670, 0.0
    %674 = vadd.xlane.f32.xlu0 %v673
    %v675 = vpop.xlane.xlu0 %674
    %v676 = vld [vmem:[#allocation6 + $0x348] sm:$0xf]
    %v677 = vld [vmem:[#allocation6 + $0x354] sm:$0xf]
    %v678 = vld [vmem:[#allocation6 + $0x360] sm:$0xf]
    %v679 = vld [vmem:[#allocation6 + $0x36c] sm:$0x3]
    %v680 = vld [vmem:[#allocation6 + $0x378] sm:$0x1]
    %v681 = vpack.c.bf16 %v658, %v658
    %v682 = vunpack.c.l.bf16 %v680
    %v683 = vlaneseq
    %v684 = vshrl.u32 %v683, 7
    %v685 = vsub.s32 0, %v684
    %v686 = vrot.slane %v682, %v685
    %v691 = vunpack.c.l.b16 %v676
    %v692 = vunpack.c.l.b16 %v677
    %v693 = vunpack.c.l.b16 %v678
    %v694 = vunpack.c.l.b16 %v679
    %v695 = vpack.c.b16 %v692, %v691
    %v696 = vpack.c.b16 %v694, %v693
    %v699 = vsel %vm672, %v681, 0
    %vm701 = vcmask 1045504
    %v703 = vsel %vm701, %v696, 0
    %705 = vmatprep.subr.bf16.mxu0 0
    %706 = vmatpush1.bf16.msra.mxu0 0
    %707 = vmatprep.subr.bf16.mxu0 0
    %708 = vmatpush1.bf16.msra.mxu0 0
    %709 = vmatprep.subr.bf16.mxu0 0
    %710 = vmatpush1.bf16.msra.mxu0 0
    %711 = vmatprep.subr.bf16.mxu0 0
    %712 = vmatpush1.bf16.msra.mxu0 0
    %713 = vmatprep.subr.bf16.mxu0 0
    %714 = vmatpush1.bf16.msra.mxu0 0
    %715 = vmatprep.subr.bf16.mxu0 0
    %716 = vmatpush1.bf16.msra.mxu0 0
    %717 = vmatprep.subr.bf16.mxu0 0
    %718 = vmatpush1.bf16.msra.mxu0 %v703
    %719 = vmatprep.subr.bf16.mxu0 0
    %720 = vmatpush1.bf16.msra.mxu0 %v695
    %721 = vmatprep.subr.bf16.mxu0 0
    %722 = vmatpush2.bf16.msra.mxu0 0
    %723 = vmatprep.subr.bf16.mxu0 0
    %724 = vmatpush2.bf16.msra.mxu0 0
    %725 = vmatprep.subr.bf16.mxu0 0
    %726 = vmatpush2.bf16.msra.mxu0 0
    %727 = vmatprep.subr.bf16.mxu0 0
    %728 = vmatpush2.bf16.msra.mxu0 0
    %729 = vmatprep.subr.bf16.mxu0 0
    %730 = vmatpush2.bf16.msra.mxu0 0
    %731 = vmatprep.subr.bf16.mxu0 0
    %732 = vmatpush2.bf16.msra.mxu0 0
    %733 = vmatprep.subr.bf16.mxu0 0
    %734 = vmatpush2.bf16.msra.mxu0 0
    %735 = vmatprep.subr.bf16.mxu0 0
    %736 = vmatpush2.bf16.msra.mxu0 0
    %737 = vmatprep.mubr.bf16.mxu0 0
    %738 = vmatmul.mubr.bf16.gmra.mxu0 %v699
    %v739 = vpop.f32.mrf.mxu0
    %v740 = vadd.f32 %v686, %v739
    %v741 = vpop.f32.mrf.mxu0
    %v742 = vpop.f32.mrf.mxu0
    %v743 = vpop.f32.mrf.mxu0
    %744 = vdwg.mxu0
    %v745 = vtanh.pop %v740
    %v746 = vadd.f32 %v180, %v745
    %v747 = vld [vmem:[#allocation6 + $0x384] sm:$0xf]
    %v748 = vld [vmem:[#allocation6 + $0x390] sm:$0xf]
    %v749 = vld [vmem:[#allocation6 + $0x39c] sm:$0xf]
    %v750 = vld [vmem:[#allocation6 + $0x3a8] sm:$0xf]
    %v751 = vld [vmem:[#allocation6 + $0x3b4] sm:$0xf]
    %v752 = vld [vmem:[#allocation6 + $0x3c0] sm:$0xf]
    %v753 = vld [vmem:[#allocation6 + $0x3cc] sm:$0xf]
    %v754 = vld [vmem:[#allocation6 + $0x3d8] sm:$0xf]
    %v755 = vld [vmem:[#allocation6 + $0x3e4] sm:$0xf]
    %v756 = vld [vmem:[#allocation6 + $0x3f0] sm:$0xf]
    %v757 = vld [vmem:[#allocation6 + $0x3fc] sm:$0xf]
    %v758 = vld [vmem:[#allocation6 + $0x408] sm:$0xf]
    %v759 = vld [vmem:[#allocation6 + $0x414] sm:$0xf]
    %v760 = vld [vmem:[#allocation6 + $0x420] sm:$0xf]
    %v761 = vld [vmem:[#allocation6 + $0x42c] sm:$0xf]
    %v762 = vld [vmem:[#allocation6 + $0x438] sm:$0xf]
    %v763 = vld [vmem:[#allocation6 + $0x444] sm:$0x1]
    %v764 = vpack.c.bf16 %v746, %v746
    %v765 = vunpack.c.l.bf16 %v763
    %v766 = vlaneseq
    %v767 = vshrl.u32 %v766, 7
    %v768 = vsub.s32 0, %v767
    %v769 = vrot.slane %v765, %v768
    %v786 = vunpack.c.l.b16 %v747
    %v787 = vunpack.c.l.b16 %v748
    %v788 = vunpack.c.l.b16 %v749
    %v789 = vunpack.c.l.b16 %v750
    %v790 = vunpack.c.l.b16 %v751
    %v791 = vunpack.c.l.b16 %v752
    %v792 = vunpack.c.l.b16 %v753
    %v793 = vunpack.c.l.b16 %v754
    %v794 = vunpack.c.l.b16 %v755
    %v795 = vunpack.c.l.b16 %v756
    %v796 = vunpack.c.l.b16 %v757
    %v797 = vunpack.c.l.b16 %v758
    %v798 = vunpack.c.l.b16 %v759
    %v799 = vunpack.c.l.b16 %v760
    %v800 = vunpack.c.l.b16 %v761
    %v801 = vunpack.c.l.b16 %v762
    %v802 = vpack.c.b16 %v787, %v786
    %v803 = vpack.c.b16 %v789, %v788
    %v804 = vpack.c.b16 %v791, %v790
    %v805 = vpack.c.b16 %v793, %v792
    %v806 = vpack.c.b16 %v795, %v794
    %v807 = vpack.c.b16 %v797, %v796
    %v808 = vpack.c.b16 %v799, %v798
    %v809 = vpack.c.b16 %v801, %v800
    %818 = vmatprep.subr.bf16.mxu0 0
    %819 = vmatpush1.bf16.msra.mxu0 %v809
    %820 = vmatprep.subr.bf16.mxu0 0
    %821 = vmatpush1.bf16.msra.mxu0 %v808
    %822 = vmatprep.subr.bf16.mxu0 0
    %823 = vmatpush1.bf16.msra.mxu0 %v807
    %824 = vmatprep.subr.bf16.mxu0 0
    %825 = vmatpush1.bf16.msra.mxu0 %v806
    %826 = vmatprep.subr.bf16.mxu0 0
    %827 = vmatpush1.bf16.msra.mxu0 %v805
    %828 = vmatprep.subr.bf16.mxu0 0
    %829 = vmatpush1.bf16.msra.mxu0 %v804
    %830 = vmatprep.subr.bf16.mxu0 0
    %831 = vmatpush1.bf16.msra.mxu0 %v803
    %832 = vmatprep.subr.bf16.mxu0 0
    %833 = vmatpush1.bf16.msra.mxu0 %v802
    %834 = vmatprep.subr.bf16.mxu0 0
    %835 = vmatpush2.bf16.msra.mxu0 0
    %836 = vmatprep.subr.bf16.mxu0 0
    %837 = vmatpush2.bf16.msra.mxu0 0
    %838 = vmatprep.subr.bf16.mxu0 0
    %839 = vmatpush2.bf16.msra.mxu0 0
    %840 = vmatprep.subr.bf16.mxu0 0
    %841 = vmatpush2.bf16.msra.mxu0 0
    %842 = vmatprep.subr.bf16.mxu0 0
    %843 = vmatpush2.bf16.msra.mxu0 0
    %844 = vmatprep.subr.bf16.mxu0 0
    %845 = vmatpush2.bf16.msra.mxu0 0
    %846 = vmatprep.subr.bf16.mxu0 0
    %847 = vmatpush2.bf16.msra.mxu0 0
    %848 = vmatprep.subr.bf16.mxu0 0
    %849 = vmatpush2.bf16.msra.mxu0 0
    %850 = vmatprep.mubr.bf16.mxu0 0
    %851 = vmatmul.mubr.bf16.gmra.mxu0 %v764
    %v852 = vpop.f32.mrf.mxu0
    %v853 = vadd.f32 %v769, %v852
    %v854 = vpop.f32.mrf.mxu0
    %v855 = vpop.f32.mrf.mxu0
    %v856 = vpop.f32.mrf.mxu0
    %857 = vdwg.mxu0
    %v858 = vtanh.pop %v853
    %v859 = vld [vmem:[#allocation6 + $0x450] sm:$0xf]
    %v860 = vld [vmem:[#allocation6 + $0x45c] sm:$0xf]
    %v861 = vld [vmem:[#allocation6 + $0x468] sm:$0xf]
    %v862 = vld [vmem:[#allocation6 + $0x474] sm:$0xf]
    %v863 = vld [vmem:[#allocation6 + $0x480] sm:$0xf]
    %v864 = vld [vmem:[#allocation6 + $0x48c] sm:$0xf]
    %v865 = vld [vmem:[#allocation6 + $0x498] sm:$0xf]
    %v866 = vld [vmem:[#allocation6 + $0x4a4] sm:$0xf]
    %v867 = vld [vmem:[#allocation6 + $0x4b0] sm:$0xf]
    %v868 = vld [vmem:[#allocation6 + $0x4bc] sm:$0xf]
    %v869 = vld [vmem:[#allocation6 + $0x4c8] sm:$0xf]
    %v870 = vld [vmem:[#allocation6 + $0x4d4] sm:$0xf]
    %v871 = vld [vmem:[#allocation6 + $0x4e0] sm:$0xf]
    %v872 = vld [vmem:[#allocation6 + $0x4ec] sm:$0xf]
    %v873 = vld [vmem:[#allocation6 + $0x4f8] sm:$0xf]
    %v874 = vld [vmem:[#allocation6 + $0x504] sm:$0xf]
    %v875 = vld [vmem:[#allocation6 + $0x510] sm:$0x1]
    %v876 = vpack.c.bf16 %v858, %v858
    %v877 = vunpack.c.l.bf16 %v875
    %v878 = vlaneseq
    %v879 = vshrl.u32 %v878, 7
    %v880 = vsub.s32 0, %v879
    %v881 = vrot.slane %v877, %v880
    %v898 = vunpack.c.l.b16 %v859
    %v899 = vunpack.c.l.b16 %v860
    %v900 = vunpack.c.l.b16 %v861
    %v901 = vunpack.c.l.b16 %v862
    %v902 = vunpack.c.l.b16 %v863
    %v903 = vunpack.c.l.b16 %v864
    %v904 = vunpack.c.l.b16 %v865
    %v905 = vunpack.c.l.b16 %v866
    %v906 = vunpack.c.l.b16 %v867
    %v907 = vunpack.c.l.b16 %v868
    %v908 = vunpack.c.l.b16 %v869
    %v909 = vunpack.c.l.b16 %v870
    %v910 = vunpack.c.l.b16 %v871
    %v911 = vunpack.c.l.b16 %v872
    %v912 = vunpack.c.l.b16 %v873
    %v913 = vunpack.c.l.b16 %v874
    %v914 = vpack.c.b16 %v899, %v898
    %v915 = vpack.c.b16 %v901, %v900
    %v916 = vpack.c.b16 %v903, %v902
    %v917 = vpack.c.b16 %v905, %v904
    %v918 = vpack.c.b16 %v907, %v906
    %v919 = vpack.c.b16 %v909, %v908
    %v920 = vpack.c.b16 %v911, %v910
    %v921 = vpack.c.b16 %v913, %v912
    %930 = vmatprep.subr.bf16.mxu0 0
    %931 = vmatpush1.bf16.msra.mxu0 %v921
    %932 = vmatprep.subr.bf16.mxu0 0
    %933 = vmatpush1.bf16.msra.mxu0 %v920
    %934 = vmatprep.subr.bf16.mxu0 0
    %935 = vmatpush1.bf16.msra.mxu0 %v919
    %936 = vmatprep.subr.bf16.mxu0 0
    %937 = vmatpush1.bf16.msra.mxu0 %v918
    %938 = vmatprep.subr.bf16.mxu0 0
    %939 = vmatpush1.bf16.msra.mxu0 %v917
    %940 = vmatprep.subr.bf16.mxu0 0
    %941 = vmatpush1.bf16.msra.mxu0 %v916
    %942 = vmatprep.subr.bf16.mxu0 0
    %943 = vmatpush1.bf16.msra.mxu0 %v915
    %944 = vmatprep.subr.bf16.mxu0 0
    %945 = vmatpush1.bf16.msra.mxu0 %v914
    %946 = vmatprep.subr.bf16.mxu0 0
    %947 = vmatpush2.bf16.msra.mxu0 0
    %948 = vmatprep.subr.bf16.mxu0 0
    %949 = vmatpush2.bf16.msra.mxu0 0
    %950 = vmatprep.subr.bf16.mxu0 0
    %951 = vmatpush2.bf16.msra.mxu0 0
    %952 = vmatprep.subr.bf16.mxu0 0
    %953 = vmatpush2.bf16.msra.mxu0 0
    %954 = vmatprep.subr.bf16.mxu0 0
    %955 = vmatpush2.bf16.msra.mxu0 0
    %956 = vmatprep.subr.bf16.mxu0 0
    %957 = vmatpush2.bf16.msra.mxu0 0
    %958 = vmatprep.subr.bf16.mxu0 0
    %959 = vmatpush2.bf16.msra.mxu0 0
    %960 = vmatprep.subr.bf16.mxu0 0
    %961 = vmatpush2.bf16.msra.mxu0 0
    %962 = vmatprep.mubr.bf16.mxu0 0
    %963 = vmatmul.mubr.bf16.gmra.mxu0 %v876
    %v964 = vpop.f32.mrf.mxu0
    %v965 = vadd.f32 %v881, %v964
    %v966 = vpop.f32.mrf.mxu0
    %v967 = vpop.f32.mrf.mxu0
    %v968 = vpop.f32.mrf.mxu0
    %969 = vdwg.mxu0
    %v970 = vtanh.pop %v965
    %v971 = vld [vmem:[#allocation6 + $0x51c] sm:$0x1]
    %v972 = vunpack.c.l.bf16 %v971
    %v973 = vld [vmem:[#allocation6 + $0x528] sm:$0x1]
    %v974 = vunpack.c.l.bf16 %v973
    %v975 = vlaneseq
    %v976 = vshrl.u32 %v975, 7
    %v977 = vsub.s32 0, %v976
    %v978 = vrot.slane %v972, %v977
    %v979 = vmul.f32 %v970, %v978
    %980 = vadd.xlane.f32.xlu0 %v979
    %v981 = vpop.xlane.xlu0 %980
    %v982 = vlaneseq
    %v983 = vshrl.u32 %v982, 7
    %v984 = vsub.s32 0, %v983
    %v985 = vrot.slane %v974, %v984
    %v986 = vadd.f32 %v981, %v985
    %v987 = vmul.f32 %v662, %v985
    %v988 = vmul.f32 %v675, %v985
    %990 = vrot.lane.b32.xlu0 %v988, 127
    %v991 = vpop.permute.xlu0 %990
    %v993 = vadd.f32 %v987, %v991
    %995 = vrot.lane.b32.xlu0 %v985, 2
    %v996 = vpop.permute.xlu0 %995
    %v998 = vmul.f32 %v986, %v996
    %1000 = vrot.lane.b32.xlu0 %v998, 124
    %v1001 = vpop.permute.xlu0 %1000
    %v1003 = vadd.f32 %v993, %v1001
    %1004 = vrot.lane.b32.xlu0 %v985, 125
    %v1005 = vpop.permute.xlu0 %1004
    %v1007 = vadd.f32 %v1003, %v1005
    %vm1008 = vcmask 7168
    %1009 = vst.msk [vmem:[%s3] sm:$0xff] %vm1008, %v1007
    // Predicated region
    $region26: #{tpu_custom_call.1} parent=1 // pred_check
      _
    $region27: #{tpu_custom_call.1} parent=1 // pred_check_branch
      %1011 = sbr.rel (0) target = $region29
    $region28: #{tpu_custom_call.1} parent=1 // pred_region
      _
    $region29: #{tpu_custom_call.1} parent=1 // pred_fallthru
      _
    // Predicated region
    $region30: #{tpu_custom_call.1} parent=1 // pred_check
      _
    $region31: #{tpu_custom_call.1} parent=1 // pred_check_branch
      %1013 = sbr.rel (0) target = $region33
    $region32: #{tpu_custom_call.1} parent=1 // pred_region
      _
    $region33: #{tpu_custom_call.1} parent=1 // pred_fallthru
      _
    %1014 = vsyncpa [#allocation3], 1
    %1015 = vsyncpa [#allocation5], 1

</llo_original>
